<compile_context>
chip_gen: v7x
topology: tpu7x:2x2x1
jax: 0.10.0
libtpu: 0.0.40
codegen_flags: <defaults>
</compile_context>

<pallas_src>
import functools
import math

import jax
import jax.numpy as jnp
from jax.experimental import pallas as pl
from jax.experimental.pallas import tpu as pltpu


# ---------------------------------------------------------------------------
# kernel: lane-dense (rows on lanes), everything transposed
def _pe_kernel(x_ref, w_ref, o_ref, *, include_input):
    x = x_ref[...]                       # (3, TM)  float32, rows on lanes
    w = w_ref[...]                       # (F, 3)   float32, F = 3*pe_dim
    F = w.shape[0]

    # tiny K=3 contraction, unrolled on the VPU (MXU would waste >97% of the
    # systolic array for K=3); result is lane-dense (F, TM).
    xw = w[:, 0:1] * x[0:1, :]
    xw = xw + w[:, 1:2] * x[1:2, :]
    xw = xw + w[:, 2:3] * x[2:3, :]      # (F, TM)

    # direct sublane slice-stores; all stores span the full 128-lane width.
    off = 0
    if include_input:
        o_ref[0:3, :] = x.astype(o_ref.dtype)
        off = 3
    o_ref[off:off + F, :] = jnp.cos(xw).astype(o_ref.dtype)
    o_ref[off + F:off + 2 * F, :] = jnp.sin(xw).astype(o_ref.dtype)


# ---------------------------------------------------------------------------
# parameter construction (matches the PyTorch module's __init__ formulas)
def _make_params(pe_type, pe_dim, D):
    if pe_type == 'gau1':
        return jax.random.normal(jax.random.PRNGKey(42), (3 * pe_dim, 3),
                                 jnp.float32) * (D / 4.0)
    if pe_type == 'gau2':
        return jax.random.normal(jax.random.PRNGKey(42), (3 * pe_dim, 3),
                                 jnp.float32) * (D / 8.0)
    if pe_type == 'geo1':
        f = float(D)
        return f * (1.0 / f) ** (jnp.arange(pe_dim, dtype=jnp.float32) /
                                 (pe_dim - 1))
    if pe_type == 'geo2':
        f = float(D) * math.pi
        return f * (1.0 / f) ** (jnp.arange(pe_dim, dtype=jnp.float32) /
                                 (pe_dim - 1))
    if pe_type == 'no':
        return None
    raise NotImplementedError(pe_type)


_TM_CAP = 8192   # lanes per grid step; output block ~1.3 MB, well under VMEM


def _pick_tile(rows):
    """Lane-axis row tile: multiple of 128, as large as sensible, and chosen
    so the grid has >= 2 steps when the input allows it (v7x megacore)."""
    rows128 = -(-rows // 128) * 128
    if rows128 <= 128:
        return 128
    half = -(-rows128 // 2)
    half128 = -(-half // 128) * 128
    return max(128, min(_TM_CAP, half128))


# ---------------------------------------------------------------------------
# wrapper
def positional_encoding(coords, *, pe_dim=6, D=128, pe_type='geo1',
                        include_input=True, gaussian_weights=None,
                        frequency_bands=None, out_dtype=jnp.float32,
                        transposed_output=False):
    """Pallas implementation of PositionalEncoding.forward.

    coords: (bsz, num_coords, 3) float32
    gaussian_weights: optional (3*pe_dim, 3) for gau* (module parameter)
    frequency_bands:  optional (pe_dim,) for geo*    (module parameter)
    out_dtype: dtype of the encoded output (float32 for exact PyTorch parity,
               bfloat16 to halve HBM writeback when the consumer is bf16)
    transposed_output: if True, return (out_dim, bsz*num_coords) and skip the
               final transpose-back pass (consumer can use dot_general).
    returns (bsz, num_coords, out_dim) (or transposed 2-D slab, see above)
    """
    assert coords.dtype == jnp.float32
    bsz, num_coords, three = coords.shape
    assert three == 3

    if pe_type == 'no':
        return coords

    # Build wT (F, 3) such that xw[f, r] = sum_c wT[f, c] * coords_r[c].
    if 'geo' in pe_type:
        assert pe_dim >= 2, "geo pe_type divides by (pe_dim - 1); need pe_dim >= 2"
        if frequency_bands is None:
            frequency_bands = _make_params(pe_type, pe_dim, D)
        freq = frequency_bands.astype(jnp.float32)
        wT = jnp.zeros((3 * pe_dim, 3), jnp.float32)
        for c in range(3):
            wT = wT.at[c * pe_dim:(c + 1) * pe_dim, c].set(freq)
    elif 'gau' in pe_type:
        if gaussian_weights is None:
            gaussian_weights = _make_params(pe_type, pe_dim, D)
        wT = gaussian_weights.astype(jnp.float32)          # already (F, 3)
    else:
        raise NotImplementedError(pe_type)

    F = 3 * pe_dim
    out_width = 2 * F + (3 if include_input else 0)

    rows = bsz * num_coords
    tm = _pick_tile(rows)
    grid = (pl.cdiv(rows, tm),)

    # cheap input transpose (12 B/row); output stays transposed unless asked.
    xT = coords.reshape(rows, 3).T                          # (3, rows)

    kernel = functools.partial(_pe_kernel, include_input=include_input)

    outT = pl.pallas_call(
        kernel,
        out_shape=jax.ShapeDtypeStruct((out_width, rows), out_dtype),
        grid_spec=pltpu.PrefetchScalarGridSpec(
            num_scalar_prefetch=0,
            grid=grid,
            in_specs=[pl.BlockSpec((3, tm), lambda i: (0, i)),
                      pl.BlockSpec((F, 3), lambda i: (0, 0))],   # tiny, resident
            out_specs=pl.BlockSpec((out_width, tm), lambda i: (0, i)),
        ),
        compiler_params=pltpu.CompilerParams(
            dimension_semantics=("parallel",)),
    )(xT, wT)

    if transposed_output:
        return outT
    # one transpose-back pass to match the PyTorch (bsz, n, out_dim) layout
    return outT.T.reshape(bsz, num_coords, out_width)


# ---------------------------------------------------------------------------
# pure-JAX reference (mirrors the PyTorch forward exactly)
def _reference(coords, params, pe_type, pe_dim, include_input):
    if pe_type == 'no':
        return coords
    enc = [coords] if include_input else []
    if 'gau' in pe_type:
        x = jnp.matmul(coords, params.T, precision=jax.lax.Precision.HIGHEST)
        enc.append(jnp.cos(x))
        enc.append(jnp.sin(x))
    else:
        bsz, n, _ = coords.shape
        x = params[None, None, None, :] * coords[:, :, :, None]
        x = x.reshape(bsz, n, -1)
        enc.append(jnp.cos(x))
        enc.append(jnp.sin(x))
    return jnp.concatenate(enc, axis=-1)


if __name__ == "__main__":
    ok = True

    # small (single block, grid=1), medium (rows=8192 -> tm=4096, grid=2),
    # ragged (rows=600 -> tm=384, grid=2, masked partial last block)
    coords_small = jax.random.normal(jax.random.PRNGKey(0), (2, 16, 3),
                                     jnp.float32)
    coords_med = jax.random.normal(jax.random.PRNGKey(1), (2, 4096, 3),
                                   jnp.float32)
    coords_ragged = jax.random.normal(jax.random.PRNGKey(2), (2, 300, 3),
                                      jnp.float32)

    for coords in (coords_small, coords_med, coords_ragged):
        b, n, _ = coords.shape
        for pe_type in ('geo1', 'geo2', 'gau1', 'gau2'):
            params = _make_params(pe_type, 6, 128)
            kwargs = ({'gaussian_weights': params} if 'gau' in pe_type
                      else {'frequency_bands': params})
            out = jax.block_until_ready(
                positional_encoding(coords, pe_dim=6, D=128, pe_type=pe_type,
                                    include_input=True, **kwargs))
            ref = _reference(coords, params, pe_type, 6, True)
            if out.shape != (b, n, 3 + 3 * 2 * 6):
                ok = False
            if not jnp.allclose(out, ref, atol=5e-4, rtol=1e-3):
                ok = False

        # include_input=False path
        fb = _make_params('geo1', 6, 128)
        out_ni = jax.block_until_ready(
            positional_encoding(coords, pe_dim=6, D=128, pe_type='geo1',
                                include_input=False, frequency_bands=fb))
        if not jnp.allclose(out_ni,
                            _reference(coords, fb, 'geo1', 6, False),
                            atol=5e-4, rtol=1e-3):
            ok = False

    # bf16 output mode (halved writeback; loose tolerance check)
    fb = _make_params('geo1', 6, 128)
    out_bf = jax.block_until_ready(
        positional_encoding(coords_small, pe_dim=6, D=128, pe_type='geo1',
                            include_input=True, frequency_bands=fb,
                            out_dtype=jnp.bfloat16))
    if not jnp.allclose(out_bf.astype(jnp.float32),
                        _reference(coords_small, fb, 'geo1', 6, True),
                        atol=6e-2, rtol=3e-2):
        ok = False

    # transposed_output fast path (skips the transpose-back pass)
    out_t = jax.block_until_ready(
        positional_encoding(coords_small, pe_dim=6, D=128, pe_type='geo1',
                            include_input=True, frequency_bands=fb,
                            transposed_output=True))
    if not jnp.allclose(out_t.T.reshape(2, 16, -1),
                        _reference(coords_small, fb, 'geo1', 6, True),
                        atol=5e-4, rtol=1e-3):
        ok = False

    # 'no' path (identity)
    out_no = jax.block_until_ready(
        positional_encoding(coords_small, pe_type='no'))
    if not jnp.allclose(out_no, coords_small):
        ok = False

    if ok:
        print("KERNEL_OK")
</pallas_src>

<mosaic_0001>
module attributes {stable_mosaic.version = 11 : i64} {
  func.func @_pe_kernel(%arg0: i32, %arg1: memref<3x128xf32, #tpu.memory_space<vmem>>, %arg2: memref<18x3xf32, #tpu.memory_space<vmem>>, %arg3: memref<39x128xf32, #tpu.memory_space<vmem>>) attributes {dimension_semantics = [#tpu.dimension_semantics<parallel>], iteration_bounds = array<i64: 1>, scalar_prefetch = 0 : i64, scratch_operands = 0 : i64, tpu.core_type = #tpu.core_type<tc>, window_params = [{transform_indices = @transform_0, window_bounds = array<i64: 3, 128>}, {pipeline_mode = #tpu.pipeline_mode<synchronous>, transform_indices = @transform_1, window_bounds = array<i64: 18, 3>}, {transform_indices = @transform_2, window_bounds = array<i64: 39, 128>}]} {
    %c0 = arith.constant 0 : index
    %c0_0 = arith.constant 0 : index
    %0 = vector.load %arg1[%c0, %c0_0] : memref<3x128xf32, #tpu.memory_space<vmem>>, vector<3x128xf32>
    %c0_1 = arith.constant 0 : index
    %c0_2 = arith.constant 0 : index
    %1 = vector.load %arg2[%c0_1, %c0_2] : memref<18x3xf32, #tpu.memory_space<vmem>>, vector<18x3xf32>
    %2 = vector.extract_strided_slice %1 {offsets = [0, 0], sizes = [18, 1], strides = [1, 1]} : vector<18x3xf32> to vector<18x1xf32>
    %3 = vector.extract_strided_slice %0 {offsets = [0, 0], sizes = [1, 128], strides = [1, 1]} : vector<3x128xf32> to vector<1x128xf32>
    %4 = vector.broadcast %2 : vector<18x1xf32> to vector<18x128xf32>
    %5 = vector.broadcast %3 : vector<1x128xf32> to vector<18x128xf32>
    %6 = arith.mulf %4, %5 : vector<18x128xf32>
    %7 = vector.extract_strided_slice %1 {offsets = [0, 1], sizes = [18, 1], strides = [1, 1]} : vector<18x3xf32> to vector<18x1xf32>
    %8 = vector.extract_strided_slice %0 {offsets = [1, 0], sizes = [1, 128], strides = [1, 1]} : vector<3x128xf32> to vector<1x128xf32>
    %9 = vector.broadcast %7 : vector<18x1xf32> to vector<18x128xf32>
    %10 = vector.broadcast %8 : vector<1x128xf32> to vector<18x128xf32>
    %11 = arith.mulf %9, %10 : vector<18x128xf32>
    %12 = arith.addf %6, %11 : vector<18x128xf32>
    %13 = vector.extract_strided_slice %1 {offsets = [0, 2], sizes = [18, 1], strides = [1, 1]} : vector<18x3xf32> to vector<18x1xf32>
    %14 = vector.extract_strided_slice %0 {offsets = [2, 0], sizes = [1, 128], strides = [1, 1]} : vector<3x128xf32> to vector<1x128xf32>
    %15 = vector.broadcast %13 : vector<18x1xf32> to vector<18x128xf32>
    %16 = vector.broadcast %14 : vector<1x128xf32> to vector<18x128xf32>
    %17 = arith.mulf %15, %16 : vector<18x128xf32>
    %18 = arith.addf %12, %17 : vector<18x128xf32>
    %c0_3 = arith.constant 0 : index
    %c0_4 = arith.constant 0 : index
    %19 = vector.load %arg3[%c0_3, %c0_4] : memref<39x128xf32, #tpu.memory_space<vmem>>, vector<3x128xf32>
    tpu.vector_store %arg3[%c0_3, %c0_4], %0 {strides = array<i32>} : memref<39x128xf32, #tpu.memory_space<vmem>>, vector<3x128xf32>,
    %20 = math.cos %18 : vector<18x128xf32>
    %c3 = arith.constant 3 : index
    %c0_5 = arith.constant 0 : index
    %21 = vector.load %arg3[%c3, %c0_5] : memref<39x128xf32, #tpu.memory_space<vmem>>, vector<18x128xf32>
    tpu.vector_store %arg3[%c3, %c0_5], %20 {strides = array<i32>} : memref<39x128xf32, #tpu.memory_space<vmem>>, vector<18x128xf32>,
    %22 = math.sin %18 : vector<18x128xf32>
    %c21 = arith.constant 21 : index
    %c0_6 = arith.constant 0 : index
    %23 = vector.load %arg3[%c21, %c0_6] : memref<39x128xf32, #tpu.memory_space<vmem>>, vector<18x128xf32>
    tpu.vector_store %arg3[%c21, %c0_6], %22 {strides = array<i32>} : memref<39x128xf32, #tpu.memory_space<vmem>>, vector<18x128xf32>,
    return
  }
  func.func @transform_0(%arg0: i32) -> (i32, i32) {
    %c0_i32 = arith.constant 0 : i32
    %c0_i32_0 = arith.constant 0 : i32
    return %c0_i32, %arg0 : i32, i32
  }
  func.func @transform_1(%arg0: i32) -> (i32, i32) {
    %c0_i32 = arith.constant 0 : i32
    %c0_i32_0 = arith.constant 0 : i32
    %c0_i32_1 = arith.constant 0 : i32
    return %c0_i32, %c0_i32_0 : i32, i32
  }
  func.func @transform_2(%arg0: i32) -> (i32, i32) {
    %c0_i32 = arith.constant 0 : i32
    %c0_i32_0 = arith.constant 0 : i32
    return %c0_i32, %arg0 : i32, i32
  }
}

</mosaic_0001>

<llo_original>
// kernel: tpu_custom_call.1
$region0: #{tpu_custom_call.1}
  #allocation0 [shape = 'u32[]', space=smem, size = 0x4, offset = 0x4, fixed_abs, tag = 'smem constant byte address 0x4 - core index']
  #allocation1 [shape = 'u32[144,128]{1,0:T(1,128)}', space=vmem, size = 0x12000, scoped, tag = 'internal scratch']
  %s0 = inlined_call_operand.vmem [shape: f32[3,32], index: 0, kind: input, shape index: {}]
  %s1 = inlined_call_operand.vmem [shape: f32[18,3], index: 1, kind: input, shape index: {}]
  %s2 = inlined_call_operand.vmem [shape: f32[39,32], index: 2, kind: output, shape index: {}]
  %s3 = sld [smem:[#allocation0]]
  $region18: #{tpu_custom_call.1} parent=0
    _
  %s5 = ssub.s32 1, %s3
  %s6 = scalar_select 0, %s5, %s3
  // Predicated region
  $region2: #{tpu_custom_call.1} parent=0 // pred_check
    _
  $region3: #{tpu_custom_call.1} parent=0 // pred_check_branch
    %8 = sbr.rel (0) target = $region5
  $region4: #{tpu_custom_call.1} parent=0 // pred_region
    _
  $region5: #{tpu_custom_call.1} parent=0 // pred_fallthru
    _
  // Predicated region
  $region6: #{tpu_custom_call.1} parent=0 // pred_check
    _
  $region7: #{tpu_custom_call.1} parent=0 // pred_check_branch
    %10 = sbr.rel (0) target = $region9
  $region8: #{tpu_custom_call.1} parent=0 // pred_region
    _
  $region9: #{tpu_custom_call.1} parent=0 // pred_fallthru
    _
  %v11 = vld [vmem:[%s0] sm:$0x7]
  %v12 = vld [vmem:[%s1] sm:$0xff]
  %v13 = vld [vmem:[%s1 + $0x8] sm:$0xff]
  %v14 = vld [vmem:[%s1 + $0x10] sm:$0x3]
  %16 = vset.pattern.permute.xlu0 0
  %17 = vperm.xlu0 %16, %v12
  %v18 = vpop.permute.xlu0 %17
  %21 = vset.pattern.permute.xlu0 0
  %22 = vperm.xlu0 %21, %v13
  %v23 = vpop.permute.xlu0 %22
  %26 = vset.pattern.permute.xlu0 0
  %27 = vperm.xlu0 %26, %v14
  %v28 = vpop.permute.xlu0 %27
  %v30 = vlaneseq
  %v31 = vshrl.u32 %v30, 7
  %v32 = vsub.s32 0, %v31
  %v33 = vrot.slane %v11, %v32
  %v34 = vmul.f32 %v18, %v33
  %v35 = vmul.f32 %v23, %v33
  %v36 = vmul.f32 %v28, %v33
  %37 = vset.pattern.permute.xlu0 1
  %38 = vperm.xlu0 %37, %v12
  %v39 = vpop.permute.xlu0 %38
  %41 = vset.pattern.permute.xlu0 1
  %42 = vperm.xlu0 %41, %v13
  %v43 = vpop.permute.xlu0 %42
  %45 = vset.pattern.permute.xlu0 1
  %46 = vperm.xlu0 %45, %v14
  %v47 = vpop.permute.xlu0 %46
  %v49 = vlaneseq
  %v50 = vshrl.u32 %v49, 7
  %v51 = vsub.s32 1, %v50
  %v52 = vrot.slane %v11, %v51
  %v53 = vmul.f32 %v39, %v52
  %v54 = vmul.f32 %v43, %v52
  %v55 = vmul.f32 %v47, %v52
  %v56 = vadd.f32 %v34, %v53
  %v57 = vadd.f32 %v35, %v54
  %v58 = vadd.f32 %v36, %v55
  %59 = vset.pattern.permute.xlu0 2
  %60 = vperm.xlu0 %59, %v12
  %v61 = vpop.permute.xlu0 %60
  %63 = vset.pattern.permute.xlu0 2
  %64 = vperm.xlu0 %63, %v13
  %v65 = vpop.permute.xlu0 %64
  %67 = vset.pattern.permute.xlu0 2
  %68 = vperm.xlu0 %67, %v14
  %v69 = vpop.permute.xlu0 %68
  %v71 = vlaneseq
  %v72 = vshrl.u32 %v71, 7
  %v73 = vsub.s32 2, %v72
  %v74 = vrot.slane %v11, %v73
  %v75 = vmul.f32 %v61, %v74
  %v76 = vmul.f32 %v65, %v74
  %v77 = vmul.f32 %v69, %v74
  %v78 = vadd.f32 %v56, %v75
  %v79 = vadd.f32 %v57, %v76
  %v80 = vadd.f32 %v58, %v77
  %81 = vst [vmem:[%s2] sm:$0x7] %v11
  %v82 = vand.u32 2147483647, %v78
  %vm83 = vcmp.le.f32.partialorder %v82, 0.7853982
  %vm84 = vcmp.lt.s32.totalorder %v78, 0
  %v85 = vand.u32 %v78, 2139095040
  %v86 = vshrl.u32 %v85, 23
  %v87 = vsub.s32 %v86, 127
  %v88 = vand.u32 2147483647, %v78
  %v89 = vand.u32 %v88, 8388607
  %v90 = vor.u32 %v89, 8388608
  %v91 = vsub.s32 0, %v90
  %v92 = vadd.s32 %v87, 1
  %vm93 = vcmp.gt.s32.totalorder %v92, 0
  %v94 = vsel %vm93, %v92, 0
  %v95 = vshrl.u32 %v94, 5
  %v96 = vand.u32 %v94, 31
  %v97 = vsub.s32 32, %v96
  %v98 = vshrl.u32 683565275, %v97
  %v99 = vshll.u32 683565275, %v96
  %v100 = vshrl.u32 2475754826, %v97
  %v101 = vor.u32 %v99, %v100
  %v102 = vshll.u32 2475754826, %v96
  %v103 = vshrl.u32 2131351028, %v97
  %v104 = vor.u32 %v102, %v103
  %v105 = vshll.u32 2131351028, %v96
  %v106 = vshrl.u32 2102212464, %v97
  %v107 = vor.u32 %v105, %v106
  %v108 = vshll.u32 2102212464, %v96
  %v109 = vshrl.u32 920167782, %v97
  %v110 = vor.u32 %v108, %v109
  %v111 = vshll.u32 920167782, %v96
  %v112 = vshrl.u32 1326507024, %v97
  %v113 = vor.u32 %v111, %v112
  %vm114 = vcmp.lt.s32.totalorder %v95, 1
  %vm115 = vcmp.lt.s32.totalorder %v95, 2
  %vm116 = vcmp.lt.s32.totalorder %v95, 3
  %vm117 = vcmp.lt.s32.totalorder %v95, 4
  %v118 = vsel %vm114, %v98, %v101
  %v119 = vsel %vm117, %v107, 2102212464
  %v120 = vsel %vm116, %v104, %v119
  %v121 = vsel %vm115, %v118, %v120
  %v122 = vsel %vm114, %v101, %v104
  %v123 = vsel %vm117, %v110, 920167782
  %v124 = vsel %vm116, %v107, %v123
  %v125 = vsel %vm115, %v122, %v124
  %v126 = vsel %vm114, %v104, %v107
  %v127 = vsel %vm117, %v113, 1326507024
  %v128 = vsel %vm116, %v110, %v127
  %v129 = vsel %vm115, %v126, %v128
  %v130 = vshll.u32 %v90, 8
  %v131 = vmul.u32.u64.compose %v130, %v129
  %v132 = vextract.low.u32 %v131
  %v133 = vextract.high.u32 %v131
  %v134 = vmul.u32.u64.compose %v130, %v125
  %v135 = vextract.low.u32 %v134
  %v136 = vextract.high.u32 %v134
  %v137 = vmul.u32 %v130, %v121
  %v138 = vadd.s32 %v133, %v135
  %vm139 = vc.u32 %v133, %v135
  %v140 = vadd.s32 %v136, 1
  %v141 = vsel %vm139, %v140, %v136
  %v142 = vadd.s32 %v137, %v141
  %v143 = vadd.s32 %v142, 536870912
  %v144 = vshrl.u32 %v143, 30
  %v145 = vshll.u32 %v144, 30
  %v146 = vsub.s32 %v142, %v145
  %vm147 = vcmp.lt.s32.totalorder %v146, 0
  %v148 = vsub.s32 0, %v146
  %v149 = vsel %vm147, %v148, %v146
  %v150 = vclz %v149
  %v151 = vsub.s32 %v150, 2
  %vm152 = vcmp.gt.s32.totalorder 0, %v151
  %v153 = vsel %vm152, 0, %v151
  %v154 = vsub.s32 32, %v153
  %v155 = vshll.u32 %v146, %v153
  %v156 = vshrl.u32 %v138, %v154
  %v157 = vor.u32 %v155, %v156
  %v158 = vsub.s32 4294967266, %v153
  %v159 = vadd.s32 %v158, 127
  %v160 = vshll.u32 %v159, 23
  %v161 = vor.u32 4788187, %v160
  %v162 = vand.u32 2147483647, %v161
  %v164 = vcvt.s32.f32 %v157
  %v165 = vmul.f32 %v164, %v162
  %v166 = vxor.u32 %v165, 2147483648
  %v167 = vsel %vm84, %v166, %v165
  %v168 = vsub.s32 4, %v144
  %v169 = vsel %vm84, %v168, %v144
  %v170 = vsel %vm83, %v78, %v167
  %v171 = vsel %vm83, 0, %v169
  %v172 = vcosq.f32.pop %v170
  %v173 = vsinq.f32.pop %v170
  %vm174 = vweird.f32 %v78
  %v175 = vand.u32 %v171, 3
  %vm176 = vcmp.lt.s32.totalorder %v175, 2
  %vm177 = vcmp.eq.s32.totalorder %v175, 0
  %v178 = vxor.u32 %v173, 2147483648
  %v179 = vsel %vm177, %v172, %v178
  %vm180 = vcmp.eq.s32.totalorder %v175, 2
  %v181 = vxor.u32 %v172, 2147483648
  %v182 = vsel %vm180, %v181, %v173
  %v183 = vsel %vm176, %v179, %v182
  %v184 = vsel %vm174, nan, %v183
  %v185 = vand.u32 2147483647, %v79
  %vm186 = vcmp.le.f32.partialorder %v185, 0.7853982
  %vm187 = vcmp.lt.s32.totalorder %v79, 0
  %v188 = vand.u32 %v79, 2139095040
  %v189 = vshrl.u32 %v188, 23
  %v190 = vsub.s32 %v189, 127
  %v191 = vand.u32 2147483647, %v79
  %v192 = vand.u32 %v191, 8388607
  %v193 = vor.u32 %v192, 8388608
  %v194 = vsub.s32 0, %v193
  %v195 = vadd.s32 %v190, 1
  %vm196 = vcmp.gt.s32.totalorder %v195, 0
  %v197 = vsel %vm196, %v195, 0
  %v198 = vshrl.u32 %v197, 5
  %v199 = vand.u32 %v197, 31
  %v200 = vsub.s32 32, %v199
  %v201 = vshrl.u32 683565275, %v200
  %v202 = vshll.u32 683565275, %v199
  %v203 = vshrl.u32 2475754826, %v200
  %v204 = vor.u32 %v202, %v203
  %v205 = vshll.u32 2475754826, %v199
  %v206 = vshrl.u32 2131351028, %v200
  %v207 = vor.u32 %v205, %v206
  %v208 = vshll.u32 2131351028, %v199
  %v209 = vshrl.u32 2102212464, %v200
  %v210 = vor.u32 %v208, %v209
  %v211 = vshll.u32 2102212464, %v199
  %v212 = vshrl.u32 920167782, %v200
  %v213 = vor.u32 %v211, %v212
  %v214 = vshll.u32 920167782, %v199
  %v215 = vshrl.u32 1326507024, %v200
  %v216 = vor.u32 %v214, %v215
  %vm217 = vcmp.lt.s32.totalorder %v198, 1
  %vm218 = vcmp.lt.s32.totalorder %v198, 2
  %vm219 = vcmp.lt.s32.totalorder %v198, 3
  %vm220 = vcmp.lt.s32.totalorder %v198, 4
  %v221 = vsel %vm217, %v201, %v204
  %v222 = vsel %vm220, %v210, 2102212464
  %v223 = vsel %vm219, %v207, %v222
  %v224 = vsel %vm218, %v221, %v223
  %v225 = vsel %vm217, %v204, %v207
  %v226 = vsel %vm220, %v213, 920167782
  %v227 = vsel %vm219, %v210, %v226
  %v228 = vsel %vm218, %v225, %v227
  %v229 = vsel %vm217, %v207, %v210
  %v230 = vsel %vm220, %v216, 1326507024
  %v231 = vsel %vm219, %v213, %v230
  %v232 = vsel %vm218, %v229, %v231
  %v233 = vshll.u32 %v193, 8
  %v234 = vmul.u32.u64.compose %v233, %v232
  %v235 = vextract.low.u32 %v234
  %v236 = vextract.high.u32 %v234
  %v237 = vmul.u32.u64.compose %v233, %v228
  %v238 = vextract.low.u32 %v237
  %v239 = vextract.high.u32 %v237
  %v240 = vmul.u32 %v233, %v224
  %v241 = vadd.s32 %v236, %v238
  %vm242 = vc.u32 %v236, %v238
  %v243 = vadd.s32 %v239, 1
  %v244 = vsel %vm242, %v243, %v239
  %v245 = vadd.s32 %v240, %v244
  %v246 = vadd.s32 %v245, 536870912
  %v247 = vshrl.u32 %v246, 30
  %v248 = vshll.u32 %v247, 30
  %v249 = vsub.s32 %v245, %v248
  %vm250 = vcmp.lt.s32.totalorder %v249, 0
  %v251 = vsub.s32 0, %v249
  %v252 = vsel %vm250, %v251, %v249
  %v253 = vclz %v252
  %v254 = vsub.s32 %v253, 2
  %vm255 = vcmp.gt.s32.totalorder 0, %v254
  %v256 = vsel %vm255, 0, %v254
  %v257 = vsub.s32 32, %v256
  %v258 = vshll.u32 %v249, %v256
  %v259 = vshrl.u32 %v241, %v257
  %v260 = vor.u32 %v258, %v259
  %v261 = vsub.s32 4294967266, %v256
  %v262 = vadd.s32 %v261, 127
  %v263 = vshll.u32 %v262, 23
  %v264 = vor.u32 4788187, %v263
  %v265 = vand.u32 2147483647, %v264
  %v267 = vcvt.s32.f32 %v260
  %v268 = vmul.f32 %v267, %v265
  %v269 = vxor.u32 %v268, 2147483648
  %v270 = vsel %vm187, %v269, %v268
  %v271 = vsub.s32 4, %v247
  %v272 = vsel %vm187, %v271, %v247
  %v273 = vsel %vm186, %v79, %v270
  %v274 = vsel %vm186, 0, %v272
  %v275 = vcosq.f32.pop %v273
  %v276 = vsinq.f32.pop %v273
  %vm277 = vweird.f32 %v79
  %v278 = vand.u32 %v274, 3
  %vm279 = vcmp.lt.s32.totalorder %v278, 2
  %vm280 = vcmp.eq.s32.totalorder %v278, 0
  %v281 = vxor.u32 %v276, 2147483648
  %v282 = vsel %vm280, %v275, %v281
  %vm283 = vcmp.eq.s32.totalorder %v278, 2
  %v284 = vxor.u32 %v275, 2147483648
  %v285 = vsel %vm283, %v284, %v276
  %v286 = vsel %vm279, %v282, %v285
  %v287 = vsel %vm277, nan, %v286
  %v288 = vand.u32 2147483647, %v80
  %vm289 = vcmp.le.f32.partialorder %v288, 0.7853982
  %vm290 = vcmp.lt.s32.totalorder %v80, 0
  %v291 = vand.u32 %v80, 2139095040
  %v292 = vshrl.u32 %v291, 23
  %v293 = vsub.s32 %v292, 127
  %v294 = vand.u32 2147483647, %v80
  %v295 = vand.u32 %v294, 8388607
  %v296 = vor.u32 %v295, 8388608
  %v297 = vsub.s32 0, %v296
  %v298 = vadd.s32 %v293, 1
  %vm299 = vcmp.gt.s32.totalorder %v298, 0
  %v300 = vsel %vm299, %v298, 0
  %v301 = vshrl.u32 %v300, 5
  %v302 = vand.u32 %v300, 31
  %v303 = vsub.s32 32, %v302
  %v304 = vshrl.u32 683565275, %v303
  %v305 = vshll.u32 683565275, %v302
  %v306 = vshrl.u32 2475754826, %v303
  %v307 = vor.u32 %v305, %v306
  %v308 = vshll.u32 2475754826, %v302
  %v309 = vshrl.u32 2131351028, %v303
  %v310 = vor.u32 %v308, %v309
  %v311 = vshll.u32 2131351028, %v302
  %v312 = vshrl.u32 2102212464, %v303
  %v313 = vor.u32 %v311, %v312
  %v314 = vshll.u32 2102212464, %v302
  %v315 = vshrl.u32 920167782, %v303
  %v316 = vor.u32 %v314, %v315
  %v317 = vshll.u32 920167782, %v302
  %v318 = vshrl.u32 1326507024, %v303
  %v319 = vor.u32 %v317, %v318
  %vm320 = vcmp.lt.s32.totalorder %v301, 1
  %vm321 = vcmp.lt.s32.totalorder %v301, 2
  %vm322 = vcmp.lt.s32.totalorder %v301, 3
  %vm323 = vcmp.lt.s32.totalorder %v301, 4
  %v324 = vsel %vm320, %v304, %v307
  %v325 = vsel %vm323, %v313, 2102212464
  %v326 = vsel %vm322, %v310, %v325
  %v327 = vsel %vm321, %v324, %v326
  %v328 = vsel %vm320, %v307, %v310
  %v329 = vsel %vm323, %v316, 920167782
  %v330 = vsel %vm322, %v313, %v329
  %v331 = vsel %vm321, %v328, %v330
  %v332 = vsel %vm320, %v310, %v313
  %v333 = vsel %vm323, %v319, 1326507024
  %v334 = vsel %vm322, %v316, %v333
  %v335 = vsel %vm321, %v332, %v334
  %v336 = vshll.u32 %v296, 8
  %v337 = vmul.u32.u64.compose %v336, %v335
  %v338 = vextract.low.u32 %v337
  %v339 = vextract.high.u32 %v337
  %v340 = vmul.u32.u64.compose %v336, %v331
  %v341 = vextract.low.u32 %v340
  %v342 = vextract.high.u32 %v340
  %v343 = vmul.u32 %v336, %v327
  %v344 = vadd.s32 %v339, %v341
  %vm345 = vc.u32 %v339, %v341
  %v346 = vadd.s32 %v342, 1
  %v347 = vsel %vm345, %v346, %v342
  %v348 = vadd.s32 %v343, %v347
  %v349 = vadd.s32 %v348, 536870912
  %v350 = vshrl.u32 %v349, 30
  %v351 = vshll.u32 %v350, 30
  %v352 = vsub.s32 %v348, %v351
  %vm353 = vcmp.lt.s32.totalorder %v352, 0
  %v354 = vsub.s32 0, %v352
  %v355 = vsel %vm353, %v354, %v352
  %v356 = vclz %v355
  %v357 = vsub.s32 %v356, 2
  %vm358 = vcmp.gt.s32.totalorder 0, %v357
  %v359 = vsel %vm358, 0, %v357
  %v360 = vsub.s32 32, %v359
  %v361 = vshll.u32 %v352, %v359
  %v362 = vshrl.u32 %v344, %v360
  %v363 = vor.u32 %v361, %v362
  %v364 = vsub.s32 4294967266, %v359
  %v365 = vadd.s32 %v364, 127
  %v366 = vshll.u32 %v365, 23
  %v367 = vor.u32 4788187, %v366
  %v368 = vand.u32 2147483647, %v367
  %v370 = vcvt.s32.f32 %v363
  %v371 = vmul.f32 %v370, %v368
  %v372 = vxor.u32 %v371, 2147483648
  %v373 = vsel %vm290, %v372, %v371
  %v374 = vsub.s32 4, %v350
  %v375 = vsel %vm290, %v374, %v350
  %v376 = vsel %vm289, %v80, %v373
  %v377 = vsel %vm289, 0, %v375
  %v378 = vcosq.f32.pop %v376
  %v379 = vsinq.f32.pop %v376
  %vm380 = vweird.f32 %v80
  %v381 = vand.u32 %v377, 3
  %vm382 = vcmp.lt.s32.totalorder %v381, 2
  %vm383 = vcmp.eq.s32.totalorder %v381, 0
  %v384 = vxor.u32 %v379, 2147483648
  %v385 = vsel %vm383, %v378, %v384
  %vm386 = vcmp.eq.s32.totalorder %v381, 2
  %v387 = vxor.u32 %v378, 2147483648
  %v388 = vsel %vm386, %v387, %v379
  %v389 = vsel %vm382, %v385, %v388
  %v390 = vsel %vm380, nan, %v389
  %391 = vst [vmem:[%s2 + $0x3] sm:$0xff] %v184
  %392 = vst [vmem:[%s2 + $0xb] sm:$0xff] %v287
  %393 = vst [vmem:[%s2 + $0x13] sm:$0x3] %v390
  %v394 = vand.u32 2147483647, %v78
  %vm395 = vcmp.le.f32.partialorder %v394, 0.7853982
  %vm396 = vcmp.lt.s32.totalorder %v78, 0
  %v397 = vand.u32 %v78, 2139095040
  %v398 = vshrl.u32 %v397, 23
  %v399 = vsub.s32 %v398, 127
  %v400 = vand.u32 2147483647, %v78
  %v401 = vand.u32 %v400, 8388607
  %v402 = vor.u32 %v401, 8388608
  %v403 = vsub.s32 0, %v402
  %v404 = vadd.s32 %v399, 1
  %vm405 = vcmp.gt.s32.totalorder %v404, 0
  %v406 = vsel %vm405, %v404, 0
  %v407 = vshrl.u32 %v406, 5
  %v408 = vand.u32 %v406, 31
  %v409 = vsub.s32 32, %v408
  %v410 = vshrl.u32 683565275, %v409
  %v411 = vshll.u32 683565275, %v408
  %v412 = vshrl.u32 2475754826, %v409
  %v413 = vor.u32 %v411, %v412
  %v414 = vshll.u32 2475754826, %v408
  %v415 = vshrl.u32 2131351028, %v409
  %v416 = vor.u32 %v414, %v415
  %v417 = vshll.u32 2131351028, %v408
  %v418 = vshrl.u32 2102212464, %v409
  %v419 = vor.u32 %v417, %v418
  %v420 = vshll.u32 2102212464, %v408
  %v421 = vshrl.u32 920167782, %v409
  %v422 = vor.u32 %v420, %v421
  %v423 = vshll.u32 920167782, %v408
  %v424 = vshrl.u32 1326507024, %v409
  %v425 = vor.u32 %v423, %v424
  %vm426 = vcmp.lt.s32.totalorder %v407, 1
  %vm427 = vcmp.lt.s32.totalorder %v407, 2
  %vm428 = vcmp.lt.s32.totalorder %v407, 3
  %vm429 = vcmp.lt.s32.totalorder %v407, 4
  %v430 = vsel %vm426, %v410, %v413
  %v431 = vsel %vm429, %v419, 2102212464
  %v432 = vsel %vm428, %v416, %v431
  %v433 = vsel %vm427, %v430, %v432
  %v434 = vsel %vm426, %v413, %v416
  %v435 = vsel %vm429, %v422, 920167782
  %v436 = vsel %vm428, %v419, %v435
  %v437 = vsel %vm427, %v434, %v436
  %v438 = vsel %vm426, %v416, %v419
  %v439 = vsel %vm429, %v425, 1326507024
  %v440 = vsel %vm428, %v422, %v439
  %v441 = vsel %vm427, %v438, %v440
  %v442 = vshll.u32 %v402, 8
  %v443 = vmul.u32.u64.compose %v442, %v441
  %v444 = vextract.low.u32 %v443
  %v445 = vextract.high.u32 %v443
  %v446 = vmul.u32.u64.compose %v442, %v437
  %v447 = vextract.low.u32 %v446
  %v448 = vextract.high.u32 %v446
  %v449 = vmul.u32 %v442, %v433
  %v450 = vadd.s32 %v445, %v447
  %vm451 = vc.u32 %v445, %v447
  %v452 = vadd.s32 %v448, 1
  %v453 = vsel %vm451, %v452, %v448
  %v454 = vadd.s32 %v449, %v453
  %v455 = vadd.s32 %v454, 536870912
  %v456 = vshrl.u32 %v455, 30
  %v457 = vshll.u32 %v456, 30
  %v458 = vsub.s32 %v454, %v457
  %vm459 = vcmp.lt.s32.totalorder %v458, 0
  %v460 = vsub.s32 0, %v458
  %v461 = vsel %vm459, %v460, %v458
  %v462 = vclz %v461
  %v463 = vsub.s32 %v462, 2
  %vm464 = vcmp.gt.s32.totalorder 0, %v463
  %v465 = vsel %vm464, 0, %v463
  %v466 = vsub.s32 32, %v465
  %v467 = vshll.u32 %v458, %v465
  %v468 = vshrl.u32 %v450, %v466
  %v469 = vor.u32 %v467, %v468
  %v470 = vsub.s32 4294967266, %v465
  %v471 = vadd.s32 %v470, 127
  %v472 = vshll.u32 %v471, 23
  %v473 = vor.u32 4788187, %v472
  %v474 = vand.u32 2147483647, %v473
  %v476 = vcvt.s32.f32 %v469
  %v477 = vmul.f32 %v476, %v474
  %v478 = vxor.u32 %v477, 2147483648
  %v479 = vsel %vm396, %v478, %v477
  %v480 = vsub.s32 4, %v456
  %v481 = vsel %vm396, %v480, %v456
  %v482 = vsel %vm395, %v78, %v479
  %v483 = vsel %vm395, 0, %v481
  %v484 = vcosq.f32.pop %v482
  %v485 = vsinq.f32.pop %v482
  %vm486 = vweird.f32 %v78
  %v487 = vadd.s32 %v483, 3
  %v488 = vand.u32 %v487, 3
  %vm489 = vcmp.lt.s32.totalorder %v488, 2
  %vm490 = vcmp.eq.s32.totalorder %v488, 0
  %v491 = vxor.u32 %v485, 2147483648
  %v492 = vsel %vm490, %v484, %v491
  %vm493 = vcmp.eq.s32.totalorder %v488, 2
  %v494 = vxor.u32 %v484, 2147483648
  %v495 = vsel %vm493, %v494, %v485
  %v496 = vsel %vm489, %v492, %v495
  %v497 = vsel %vm486, nan, %v496
  %v498 = vand.u32 2147483647, %v79
  %vm499 = vcmp.le.f32.partialorder %v498, 0.7853982
  %vm500 = vcmp.lt.s32.totalorder %v79, 0
  %v501 = vand.u32 %v79, 2139095040
  %v502 = vshrl.u32 %v501, 23
  %v503 = vsub.s32 %v502, 127
  %v504 = vand.u32 2147483647, %v79
  %v505 = vand.u32 %v504, 8388607
  %v506 = vor.u32 %v505, 8388608
  %v507 = vsub.s32 0, %v506
  %v508 = vadd.s32 %v503, 1
  %vm509 = vcmp.gt.s32.totalorder %v508, 0
  %v510 = vsel %vm509, %v508, 0
  %v511 = vshrl.u32 %v510, 5
  %v512 = vand.u32 %v510, 31
  %v513 = vsub.s32 32, %v512
  %v514 = vshrl.u32 683565275, %v513
  %v515 = vshll.u32 683565275, %v512
  %v516 = vshrl.u32 2475754826, %v513
  %v517 = vor.u32 %v515, %v516
  %v518 = vshll.u32 2475754826, %v512
  %v519 = vshrl.u32 2131351028, %v513
  %v520 = vor.u32 %v518, %v519
  %v521 = vshll.u32 2131351028, %v512
  %v522 = vshrl.u32 2102212464, %v513
  %v523 = vor.u32 %v521, %v522
  %v524 = vshll.u32 2102212464, %v512
  %v525 = vshrl.u32 920167782, %v513
  %v526 = vor.u32 %v524, %v525
  %v527 = vshll.u32 920167782, %v512
  %v528 = vshrl.u32 1326507024, %v513
  %v529 = vor.u32 %v527, %v528
  %vm530 = vcmp.lt.s32.totalorder %v511, 1
  %vm531 = vcmp.lt.s32.totalorder %v511, 2
  %vm532 = vcmp.lt.s32.totalorder %v511, 3
  %vm533 = vcmp.lt.s32.totalorder %v511, 4
  %v534 = vsel %vm530, %v514, %v517
  %v535 = vsel %vm533, %v523, 2102212464
  %v536 = vsel %vm532, %v520, %v535
  %v537 = vsel %vm531, %v534, %v536
  %v538 = vsel %vm530, %v517, %v520
  %v539 = vsel %vm533, %v526, 920167782
  %v540 = vsel %vm532, %v523, %v539
  %v541 = vsel %vm531, %v538, %v540
  %v542 = vsel %vm530, %v520, %v523
  %v543 = vsel %vm533, %v529, 1326507024
  %v544 = vsel %vm532, %v526, %v543
  %v545 = vsel %vm531, %v542, %v544
  %v546 = vshll.u32 %v506, 8
  %v547 = vmul.u32.u64.compose %v546, %v545
  %v548 = vextract.low.u32 %v547
  %v549 = vextract.high.u32 %v547
  %v550 = vmul.u32.u64.compose %v546, %v541
  %v551 = vextract.low.u32 %v550
  %v552 = vextract.high.u32 %v550
  %v553 = vmul.u32 %v546, %v537
  %v554 = vadd.s32 %v549, %v551
  %vm555 = vc.u32 %v549, %v551
  %v556 = vadd.s32 %v552, 1
  %v557 = vsel %vm555, %v556, %v552
  %v558 = vadd.s32 %v553, %v557
  %v559 = vadd.s32 %v558, 536870912
  %v560 = vshrl.u32 %v559, 30
  %v561 = vshll.u32 %v560, 30
  %v562 = vsub.s32 %v558, %v561
  %vm563 = vcmp.lt.s32.totalorder %v562, 0
  %v564 = vsub.s32 0, %v562
  %v565 = vsel %vm563, %v564, %v562
  %v566 = vclz %v565
  %v567 = vsub.s32 %v566, 2
  %vm568 = vcmp.gt.s32.totalorder 0, %v567
  %v569 = vsel %vm568, 0, %v567
  %v570 = vsub.s32 32, %v569
  %v571 = vshll.u32 %v562, %v569
  %v572 = vshrl.u32 %v554, %v570
  %v573 = vor.u32 %v571, %v572
  %v574 = vsub.s32 4294967266, %v569
  %v575 = vadd.s32 %v574, 127
  %v576 = vshll.u32 %v575, 23
  %v577 = vor.u32 4788187, %v576
  %v578 = vand.u32 2147483647, %v577
  %v580 = vcvt.s32.f32 %v573
  %v581 = vmul.f32 %v580, %v578
  %v582 = vxor.u32 %v581, 2147483648
  %v583 = vsel %vm500, %v582, %v581
  %v584 = vsub.s32 4, %v560
  %v585 = vsel %vm500, %v584, %v560
  %v586 = vsel %vm499, %v79, %v583
  %v587 = vsel %vm499, 0, %v585
  %v588 = vcosq.f32.pop %v586
  %v589 = vsinq.f32.pop %v586
  %vm590 = vweird.f32 %v79
  %v591 = vadd.s32 %v587, 3
  %v592 = vand.u32 %v591, 3
  %vm593 = vcmp.lt.s32.totalorder %v592, 2
  %vm594 = vcmp.eq.s32.totalorder %v592, 0
  %v595 = vxor.u32 %v589, 2147483648
  %v596 = vsel %vm594, %v588, %v595
  %vm597 = vcmp.eq.s32.totalorder %v592, 2
  %v598 = vxor.u32 %v588, 2147483648
  %v599 = vsel %vm597, %v598, %v589
  %v600 = vsel %vm593, %v596, %v599
  %v601 = vsel %vm590, nan, %v600
  %v602 = vand.u32 2147483647, %v80
  %vm603 = vcmp.le.f32.partialorder %v602, 0.7853982
  %vm604 = vcmp.lt.s32.totalorder %v80, 0
  %v605 = vand.u32 %v80, 2139095040
  %v606 = vshrl.u32 %v605, 23
  %v607 = vsub.s32 %v606, 127
  %v608 = vand.u32 2147483647, %v80
  %v609 = vand.u32 %v608, 8388607
  %v610 = vor.u32 %v609, 8388608
  %v611 = vsub.s32 0, %v610
  %v612 = vadd.s32 %v607, 1
  %vm613 = vcmp.gt.s32.totalorder %v612, 0
  %v614 = vsel %vm613, %v612, 0
  %v615 = vshrl.u32 %v614, 5
  %v616 = vand.u32 %v614, 31
  %v617 = vsub.s32 32, %v616
  %v618 = vshrl.u32 683565275, %v617
  %v619 = vshll.u32 683565275, %v616
  %v620 = vshrl.u32 2475754826, %v617
  %v621 = vor.u32 %v619, %v620
  %v622 = vshll.u32 2475754826, %v616
  %v623 = vshrl.u32 2131351028, %v617
  %v624 = vor.u32 %v622, %v623
  %v625 = vshll.u32 2131351028, %v616
  %v626 = vshrl.u32 2102212464, %v617
  %v627 = vor.u32 %v625, %v626
  %v628 = vshll.u32 2102212464, %v616
  %v629 = vshrl.u32 920167782, %v617
  %v630 = vor.u32 %v628, %v629
  %v631 = vshll.u32 920167782, %v616
  %v632 = vshrl.u32 1326507024, %v617
  %v633 = vor.u32 %v631, %v632
  %vm634 = vcmp.lt.s32.totalorder %v615, 1
  %vm635 = vcmp.lt.s32.totalorder %v615, 2
  %vm636 = vcmp.lt.s32.totalorder %v615, 3
  %vm637 = vcmp.lt.s32.totalorder %v615, 4
  %v638 = vsel %vm634, %v618, %v621
  %v639 = vsel %vm637, %v627, 2102212464
  %v640 = vsel %vm636, %v624, %v639
  %v641 = vsel %vm635, %v638, %v640
  %v642 = vsel %vm634, %v621, %v624
  %v643 = vsel %vm637, %v630, 920167782
  %v644 = vsel %vm636, %v627, %v643
  %v645 = vsel %vm635, %v642, %v644
  %v646 = vsel %vm634, %v624, %v627
  %v647 = vsel %vm637, %v633, 1326507024
  %v648 = vsel %vm636, %v630, %v647
  %v649 = vsel %vm635, %v646, %v648
  %v650 = vshll.u32 %v610, 8
  %v651 = vmul.u32.u64.compose %v650, %v649
  %v652 = vextract.low.u32 %v651
  %v653 = vextract.high.u32 %v651
  %v654 = vmul.u32.u64.compose %v650, %v645
  %v655 = vextract.low.u32 %v654
  %v656 = vextract.high.u32 %v654
  %v657 = vmul.u32 %v650, %v641
  %v658 = vadd.s32 %v653, %v655
  %vm659 = vc.u32 %v653, %v655
  %v660 = vadd.s32 %v656, 1
  %v661 = vsel %vm659, %v660, %v656
  %v662 = vadd.s32 %v657, %v661
  %v663 = vadd.s32 %v662, 536870912
  %v664 = vshrl.u32 %v663, 30
  %v665 = vshll.u32 %v664, 30
  %v666 = vsub.s32 %v662, %v665
  %vm667 = vcmp.lt.s32.totalorder %v666, 0
  %v668 = vsub.s32 0, %v666
  %v669 = vsel %vm667, %v668, %v666
  %v670 = vclz %v669
  %v671 = vsub.s32 %v670, 2
  %vm672 = vcmp.gt.s32.totalorder 0, %v671
  %v673 = vsel %vm672, 0, %v671
  %v674 = vsub.s32 32, %v673
  %v675 = vshll.u32 %v666, %v673
  %v676 = vshrl.u32 %v658, %v674
  %v677 = vor.u32 %v675, %v676
  %v678 = vsub.s32 4294967266, %v673
  %v679 = vadd.s32 %v678, 127
  %v680 = vshll.u32 %v679, 23
  %v681 = vor.u32 4788187, %v680
  %v682 = vand.u32 2147483647, %v681
  %v684 = vcvt.s32.f32 %v677
  %v685 = vmul.f32 %v684, %v682
  %v686 = vxor.u32 %v685, 2147483648
  %v687 = vsel %vm604, %v686, %v685
  %v688 = vsub.s32 4, %v664
  %v689 = vsel %vm604, %v688, %v664
  %v690 = vsel %vm603, %v80, %v687
  %v691 = vsel %vm603, 0, %v689
  %v692 = vcosq.f32.pop %v690
  %v693 = vsinq.f32.pop %v690
  %vm694 = vweird.f32 %v80
  %v695 = vadd.s32 %v691, 3
  %v696 = vand.u32 %v695, 3
  %vm697 = vcmp.lt.s32.totalorder %v696, 2
  %vm698 = vcmp.eq.s32.totalorder %v696, 0
  %v699 = vxor.u32 %v693, 2147483648
  %v700 = vsel %vm698, %v692, %v699
  %vm701 = vcmp.eq.s32.totalorder %v696, 2
  %v702 = vxor.u32 %v692, 2147483648
  %v703 = vsel %vm701, %v702, %v693
  %v704 = vsel %vm697, %v700, %v703
  %v705 = vsel %vm694, nan, %v704
  %706 = vst [vmem:[%s2 + $0x15] sm:$0xff] %v497
  %707 = vst [vmem:[%s2 + $0x1d] sm:$0xff] %v601
  %708 = vst [vmem:[%s2 + $0x25] sm:$0x3] %v705
  // Predicated region
  $region10: #{tpu_custom_call.1} parent=0 // pred_check
    _
  $region11: #{tpu_custom_call.1} parent=0 // pred_check_branch
    %710 = sbr.rel (0) target = $region13
  $region12: #{tpu_custom_call.1} parent=0 // pred_region
    _
  $region13: #{tpu_custom_call.1} parent=0 // pred_fallthru
    _
  // Predicated region
  $region14: #{tpu_custom_call.1} parent=0 // pred_check
    _
  $region15: #{tpu_custom_call.1} parent=0 // pred_check_branch
    %712 = sbr.rel (0) target = $region17
  $region16: #{tpu_custom_call.1} parent=0 // pred_region
    _
  $region17: #{tpu_custom_call.1} parent=0 // pred_fallthru
    _

</llo_original>
